<compile_context>
chip_gen: v7x
topology: tpu7x:2x2x1
jax: 0.10.0
libtpu: 0.0.40
codegen_flags: <defaults>
</compile_context>

<pallas_src>
import functools

import jax
import jax.numpy as jnp
import numpy as np
from jax.experimental import pallas as pl
from jax.experimental.pallas import tpu as pltpu


# --------------------------------------------------------------------------------------
# Helpers
# --------------------------------------------------------------------------------------
def _round_up(x, m):
    return ((x + m - 1) // m) * m


_VMEM_LIMIT_CACHE = None


def _vmem_limit_bytes():
    """Generation-aware scoped-VMEM limit (~3/4 of physical per-core VMEM)."""
    global _VMEM_LIMIT_CACHE
    if _VMEM_LIMIT_CACHE is None:
        limit = 48 * 1024 * 1024  # safe default: fits v7x's 64 MiB physical VMEM
        try:
            cap = getattr(pltpu.get_tpu_info(), "vmem_capacity_bytes", None)
            if cap:
                limit = int(min(cap * 3 // 4, 100 * 1024 * 1024))
        except Exception:
            pass
        _VMEM_LIMIT_CACHE = limit
    return _VMEM_LIMIT_CACHE


def _choose_tile(dim, candidates, align):
    """Largest candidate tile dividing round_up(dim, align) (so padding is a no-op);
    fall back to the largest candidate (with real padding) otherwise."""
    d = _round_up(max(dim, align), align)
    for c in candidates:
        if d % c == 0:
            return c, d
    return candidates[0], _round_up(dim, candidates[0])


# --------------------------------------------------------------------------------------
# Kernel 1: tiled matmul + bias (+ optional ReLU), bf16 operands, f32 accumulator.
# Grid = (M/tm, N/tn, K/tk), reduction axis last.
# --------------------------------------------------------------------------------------
def _mm_bias_kernel(a_ref, w_ref, b_ref, o_ref, acc_ref, *, relu):
    k = pl.program_id(2)

    @pl.when(k == 0)
    def _():
        acc_ref[...] = jnp.zeros_like(acc_ref)

    acc_ref[...] += jnp.dot(a_ref[...], w_ref[...],
                            preferred_element_type=jnp.float32)

    @pl.when(k == pl.num_programs(2) - 1)
    def _():
        r = acc_ref[...] + b_ref[...]
        if relu:
            r = jnp.maximum(r, 0.0)
        o_ref[...] = r.astype(o_ref.dtype)


def pallas_matmul_bias(a, w, b, *, relu=False, out_dtype=jnp.bfloat16):
    """relu(a @ w + b) with bf16 operands / f32 accumulation. a:(M,K) w:(K,N) b:(N,)."""
    M, K = a.shape
    _, N = w.shape
    # Large tiles (VMEM is plentiful for these sizes) chosen as divisors so pads are
    # no-ops; tn/tk stay multiples of 128 (lane-dense, MXU-friendly).
    tn, Np = _choose_tile(N, (512, 256, 128), 128)
    tm, Mp = _choose_tile(M, (512, 256, 128, 64, 32, 16, 8), 8)
    tk, Kp = _choose_tile(K, (512, 256, 128), 128)

    a_p = a.astype(jnp.bfloat16)
    if (Mp, Kp) != (M, K):
        a_p = jnp.pad(a_p, ((0, Mp - M), (0, Kp - K)))
    w_p = w.astype(jnp.bfloat16)
    if (Kp, Np) != (K, N):
        w_p = jnp.pad(w_p, ((0, Kp - K), (0, Np - N)))
    b_p = b.astype(jnp.float32)
    if Np != N:
        b_p = jnp.pad(b_p, (0, Np - N))
    b_p = b_p.reshape(1, Np)

    out = pl.pallas_call(
        functools.partial(_mm_bias_kernel, relu=relu),
        out_shape=jax.ShapeDtypeStruct((Mp, Np), out_dtype),
        grid=(Mp // tm, Np // tn, Kp // tk),
        in_specs=[
            pl.BlockSpec((tm, tk), lambda i, j, k: (i, k)),
            pl.BlockSpec((tk, tn), lambda i, j, k: (k, j)),
            pl.BlockSpec((1, tn), lambda i, j, k: (0, j)),
        ],
        out_specs=pl.BlockSpec((tm, tn), lambda i, j, k: (i, j)),
        scratch_shapes=[pltpu.VMEM((tm, tn), jnp.float32)],
        compiler_params=pltpu.CompilerParams(
            dimension_semantics=("parallel", "parallel", "arbitrary"),
            vmem_limit_bytes=_vmem_limit_bytes()),
        cost_estimate=pl.CostEstimate(
            flops=2 * Mp * Np * Kp,
            transcendentals=0,
            bytes_accessed=2 * (Mp * Kp + Kp * Np + Mp * Np)),
    )(a_p, w_p, b_p)
    return out[:M, :N]


# --------------------------------------------------------------------------------------
# Kernel 2: direct 3x3 / stride-1 / pad-1 conv, no im2col in HBM.
# Activation layout: zero-padded spatial grid flattened to rows (NF, Hp*Wp, C); the
# kernel receives a row-extended view so that tap (i, j) is the contiguous slice
# rows [i*Wp + j : i*Wp + j + M].  Grid = (Cout tiles, frame) with Cout tiles
# outermost so the (9, Cin, tn) weight tile is fetched once per Cout tile and stays
# resident in VMEM across all frames; the full Cin reduction runs in-kernel.
# Bias / ReLU / residual-add / iota border-mask are fused into the finalize step.
# --------------------------------------------------------------------------------------
def _conv3x3_kernel(x_ref, w_ref, b_ref, *rest, wp, m, relu, add_residual):
    if add_residual:
        r_ref, o_ref = rest
    else:
        (o_ref,) = rest

    # 9-tap direct conv; accumulate straight into one f32 value (no scratch slab).
    acc = jnp.dot(x_ref[0:m, :], w_ref[0], preferred_element_type=jnp.float32)
    for t in range(1, 9):
        i, j = divmod(t, 3)
        off = i * wp + j
        acc = acc + jnp.dot(x_ref[off:off + m, :], w_ref[t],
                            preferred_element_type=jnp.float32)

    r = acc + b_ref[...]
    if relu:
        r = jnp.maximum(r, 0.0)
    if add_residual:
        r = r + r_ref[...].astype(jnp.float32)

    # Zero the padded border ring so the next conv sees correct zero padding.
    # Column index recovered exactly with f32 arithmetic (row << 2^24); no int div.
    rows_i = jax.lax.broadcasted_iota(jnp.int32, r.shape, 0)
    rows = rows_i.astype(jnp.float32)
    h_idx = jnp.floor((rows + 0.5) * (1.0 / wp))
    col = rows - h_idx * wp
    interior = ((rows_i >= wp) & (rows_i < m - wp)
                & (col >= 0.5) & (col <= wp - 1.5))
    r = jnp.where(interior, r, 0.0)
    o_ref[...] = r.astype(o_ref.dtype)


def _pick_conv_tn(cp, m, m_ext, with_residual):
    """Largest Cout tile (multiple of 128 dividing cp) whose live VMEM fits budget."""
    budget = int(_vmem_limit_bytes() * 0.6)
    for tn in (512, 256, 128):
        if cp % tn:
            continue
        x_b = 2 * m_ext * cp * 2                    # bf16, double-buffered
        w_b = 2 * 9 * cp * tn * 2
        o_b = 2 * m * tn * 2
        r_b = 2 * m * tn * 2 if with_residual else 0
        acc_b = 2 * m * tn * 4                      # f32 accumulator + headroom
        if x_b + w_b + o_b + r_b + acc_b <= budget:
            return tn
    return 128


def pallas_conv3x3(x_pf, weight, bias, oh, ow, *, relu=False, residual=None,
                   out_dtype=jnp.bfloat16):
    """x_pf: (NF, (oh+2)*(ow+2), Cp) zero-border padded-flat activation.
    weight: (Cout, Cin, 3, 3) torch layout; bias: (Cout,).  Returns same layout."""
    NF, M, Cp = x_pf.shape
    hp, wp = oh + 2, ow + 2
    assert M == hp * wp
    cout, cin = weight.shape[0], weight.shape[1]

    # Extend rows so every tap offset is a valid contiguous static slice.
    ext = wp + 1
    m_ext = M + 2 * ext
    tn = _pick_conv_tn(Cp, M, m_ext, residual is not None)

    x_ext = jnp.pad(x_pf.astype(jnp.bfloat16), ((0, 0), (ext, ext), (0, 0)))

    w9 = jnp.transpose(weight, (2, 3, 1, 0)).reshape(9, cin, cout)
    w9 = jnp.pad(w9, ((0, 0), (0, Cp - cin), (0, Cp - cout))).astype(jnp.bfloat16)
    b_p = jnp.pad(bias.astype(jnp.float32), (0, Cp - cout)).reshape(1, Cp)

    # Cout tiles outermost, frames innermost -> weight tile resident across all frames.
    in_specs = [
        pl.BlockSpec((None, m_ext, Cp), lambda jo, f: (f, 0, 0)),
        pl.BlockSpec((9, Cp, tn), lambda jo, f: (0, 0, jo)),
        pl.BlockSpec((1, tn), lambda jo, f: (0, jo)),
    ]
    args = [x_ext, w9, b_p]
    if residual is not None:
        in_specs.append(pl.BlockSpec((None, M, tn), lambda jo, f: (f, 0, jo)))
        args.append(residual.astype(jnp.bfloat16))

    # TODO(synk): for very large latents on v7x (64 MiB VMEM), add a spatial grid axis
    # tiling M in multiples of wp with a +/-(wp+1)-row halo so blocks stop scaling
    # with frame area (also raises megacore occupancy).
    n_jo = Cp // tn
    return pl.pallas_call(
        functools.partial(_conv3x3_kernel, wp=wp, m=M, relu=relu,
                          add_residual=residual is not None),
        out_shape=jax.ShapeDtypeStruct((NF, M, Cp), out_dtype),
        grid=(n_jo, NF),
        in_specs=in_specs,
        out_specs=pl.BlockSpec((None, M, tn), lambda jo, f: (f, 0, jo)),
        compiler_params=pltpu.CompilerParams(
            dimension_semantics=("parallel", "parallel"),
            vmem_limit_bytes=_vmem_limit_bytes()),
        cost_estimate=pl.CostEstimate(
            flops=2 * 9 * NF * M * Cp * Cp,
            transcendentals=0,
            bytes_accessed=2 * (n_jo * NF * m_ext * Cp + 9 * Cp * Cp
                                + (2 if residual is not None else 1) * NF * M * Cp
                                + NF * M * Cp)),
    )(*args)


# --------------------------------------------------------------------------------------
# Layout glue (pure reshapes / pads in XLA).
# --------------------------------------------------------------------------------------
def _pixel_unshuffle_nchw(x, r):
    """Matches torch.nn.PixelUnshuffle: (N,C,H,W) -> (N, C*r*r, H/r, W/r)."""
    N, C, H, W = x.shape
    x = x.reshape(N, C, H // r, r, W // r, r)
    x = jnp.transpose(x, (0, 1, 3, 5, 2, 4))
    return x.reshape(N, C * r * r, H // r, W // r)


def _im2col_nhwc(x, kh, kw, sh, sw):
    """General fallback im2col: (N,H,W,C) -> ((N*oh*ow, kh*kw*C), oh, ow)."""
    N, H, W, C = x.shape
    oh = (H - kh) // sh + 1
    ow = (W - kw) // sw + 1
    patches = []
    for i in range(kh):
        for j in range(kw):
            patches.append(x[:, i:i + sh * oh:sh, j:j + sw * ow:sw, :])
    cols = jnp.concatenate(patches, axis=-1)
    return cols.reshape(N * oh * ow, kh * kw * C), oh, ow


def _first_conv_cols(x, kernel_size, stride):
    """pixel_unshuffle(8) + im2col for the first conv.  When kernel_size == stride the
    taps never overlap, so everything folds into a single reshape/transpose."""
    NF, C, H, W = x.shape
    ks = kernel_size
    if ks == stride and H % (8 * ks) == 0 and W % (8 * ks) == 0:
        oh, ow = H // (8 * ks), W // (8 * ks)
        cols = x.reshape(NF, C, oh, ks, 8, ow, ks, 8)
        cols = jnp.transpose(cols, (0, 2, 5, 3, 6, 1, 4, 7))  # (n,oh,ow,ik,jk,c,dy,dx)
        return cols.reshape(NF * oh * ow, ks * ks * C * 64), oh, ow
    # General path (kernel_size != stride): explicit unshuffle + strided im2col.
    xu = _pixel_unshuffle_nchw(x, 8)
    xh = jnp.transpose(xu, (0, 2, 3, 1))
    return _im2col_nhwc(xh, ks, ks, stride, stride)


# --------------------------------------------------------------------------------------
# Parameters + forward
# --------------------------------------------------------------------------------------
def init_simple_adapter_params(key, in_dim, out_dim, kernel_size, num_residual_blocks=1):
    keys = jax.random.split(key, 2 + 4 * num_residual_blocks)
    scale = 0.05
    params = {
        "conv_w": scale * jax.random.normal(
            keys[0], (out_dim, in_dim * 64, kernel_size, kernel_size), jnp.float32),
        "conv_b": scale * jax.random.normal(keys[1], (out_dim,), jnp.float32),
        "res_blocks": [],
    }
    for b in range(num_residual_blocks):
        k0, k1, k2, k3 = keys[2 + 4 * b:2 + 4 * (b + 1)]
        params["res_blocks"].append({
            "w1": scale * jax.random.normal(k0, (out_dim, out_dim, 3, 3), jnp.float32),
            "b1": scale * jax.random.normal(k1, (out_dim,), jnp.float32),
            "w2": scale * jax.random.normal(k2, (out_dim, out_dim, 3, 3), jnp.float32),
            "b2": scale * jax.random.normal(k3, (out_dim,), jnp.float32),
        })
    return params


def simple_adapter_forward(x, params, *, kernel_size, stride):
    """x: (bs, c, f, h, w) float32 -> (bs, out_dim, f, h', w')."""
    bs, c, f, h, w = x.shape
    out_dim = params["conv_b"].shape[0]
    cp = _round_up(out_dim, 128)  # lane-dense channel padding

    # permute(0,2,1,3,4).view(bs*f, c, h, w)
    xf = jnp.transpose(x, (0, 2, 1, 3, 4)).reshape(bs * f, c, h, w)

    # --- first conv: pixel_unshuffle + patchify folded, tiled matmul+bias kernel ---
    cols, oh, ow = _first_conv_cols(xf, kernel_size, stride)
    k0 = cols.shape[1]
    w0 = jnp.transpose(params["conv_w"], (2, 3, 1, 0)).reshape(k0, out_dim)
    w0 = jnp.pad(w0, ((0, 0), (0, cp - out_dim)))
    b0 = jnp.pad(params["conv_b"], (0, cp - out_dim))
    y = pallas_matmul_bias(cols, w0, b0, relu=False)          # (bs*f*oh*ow, cp) bf16
    y = y.reshape(bs * f, oh, ow, cp)

    # --- residual blocks on zero-padded, spatially flattened layout ---
    y_pf = jnp.pad(y, ((0, 0), (1, 1), (1, 1), (0, 0))).reshape(
        bs * f, (oh + 2) * (ow + 2), cp)
    for blk in params["res_blocks"]:
        t_pf = pallas_conv3x3(y_pf, blk["w1"], blk["b1"], oh, ow, relu=True)
        y_pf = pallas_conv3x3(t_pf, blk["w2"], blk["b2"], oh, ow, residual=y_pf)

    # extract valid interior + real channels, back to (bs, out_dim, f, oh, ow)
    y = y_pf.reshape(bs * f, oh + 2, ow + 2, cp)[:, 1:1 + oh, 1:1 + ow, :out_dim]
    y = y.astype(x.dtype)
    y = jnp.transpose(y, (0, 3, 1, 2)).reshape(bs, f, out_dim, oh, ow)
    return jnp.transpose(y, (0, 2, 1, 3, 4))


# --------------------------------------------------------------------------------------
# Pure-JAX (XLA conv) reference for correctness check.
# --------------------------------------------------------------------------------------
def _ref_conv_nchw(x, w, b, stride, padding):
    y = jax.lax.conv_general_dilated(
        x, w, (stride, stride), [(padding, padding), (padding, padding)],
        dimension_numbers=("NCHW", "OIHW", "NCHW"))
    return y + b[None, :, None, None]


def simple_adapter_reference(x, params, *, kernel_size, stride):
    bs, c, f, h, w = x.shape
    x = jnp.transpose(x, (0, 2, 1, 3, 4)).reshape(bs * f, c, h, w)
    xu = _pixel_unshuffle_nchw(x, 8)
    y = _ref_conv_nchw(xu, params["conv_w"], params["conv_b"], stride, 0)
    for blk in params["res_blocks"]:
        residual = y
        t = jnp.maximum(_ref_conv_nchw(y, blk["w1"], blk["b1"], 1, 1), 0.0)
        y = _ref_conv_nchw(t, blk["w2"], blk["b2"], 1, 1) + residual
    oc, oh, ow = y.shape[1], y.shape[2], y.shape[3]
    y = y.reshape(bs, f, oc, oh, ow)
    return jnp.transpose(y, (0, 2, 1, 3, 4))


if __name__ == "__main__":
    # Small but forward-consistent shapes: h, w multiples of 8*stride.
    bs, c, f, h, w = 1, 2, 2, 32, 32
    in_dim, out_dim = c, 32
    kernel_size, stride = 2, 2
    num_residual_blocks = 1

    key = jax.random.PRNGKey(0)
    kx, kp = jax.random.split(key)
    x = jax.random.normal(kx, (bs, c, f, h, w), jnp.float32)
    params = init_simple_adapter_params(kp, in_dim, out_dim, kernel_size,
                                        num_residual_blocks)

    out = simple_adapter_forward(x, params, kernel_size=kernel_size, stride=stride)
    out = jax.block_until_ready(out)

    ref = simple_adapter_reference(x, params, kernel_size=kernel_size, stride=stride)
    ref = jax.block_until_ready(ref)

    assert out.shape == (bs, out_dim, f, (h // 8) // stride, (w // 8) // stride), out.shape
    # bf16 matmul operands with f32 accumulation -> loosened tolerance.
    np.testing.assert_allclose(np.asarray(out), np.asarray(ref), rtol=5e-2, atol=5e-2)

    print("KERNEL_OK")
</pallas_src>

<mosaic_0001>
module attributes {stable_mosaic.version = 11 : i64} {
  func.func @_mm_bias_kernel(%arg0: i32, %arg1: i32, %arg2: i32, %arg3: memref<8x512xbf16, #tpu.memory_space<vmem>>, %arg4: memref<512x128xbf16, #tpu.memory_space<vmem>>, %arg5: memref<1x128xf32, #tpu.memory_space<vmem>>, %arg6: memref<8x128xbf16, #tpu.memory_space<vmem>>, %arg7: memref<8x128xf32, #tpu.memory_space<vmem>>) attributes {dimension_semantics = [#tpu.dimension_semantics<parallel>, #tpu.dimension_semantics<parallel>, #tpu.dimension_semantics<arbitrary>], iteration_bounds = array<i64: 1, 1, 1>, scalar_prefetch = 0 : i64, scratch_operands = 1 : i64, tpu.core_type = #tpu.core_type<tc>, window_params = [{transform_indices = @transform_0, window_bounds = array<i64: 8, 512>}, {transform_indices = @transform_1, window_bounds = array<i64: 512, 128>}, {transform_indices = @transform_2, window_bounds = array<i64: 1, 128>}, {transform_indices = @transform_3, window_bounds = array<i64: 8, 128>}]} {
    %c0_i32 = arith.constant 0 : i32
    %0 = arith.cmpi eq, %arg2, %c0_i32 : i32
    %1 = arith.extui %0 : i1 to i32
    %c0_i32_0 = arith.constant 0 : i32
    %2 = arith.cmpi ne, %1, %c0_i32_0 : i32
    scf.if %2 {
      %cst_10 = arith.constant 0.000000e+00 : f32
      %12 = vector.broadcast %cst_10 : f32 to vector<8x128xf32>
      %c0_11 = arith.constant 0 : index
      %c0_12 = arith.constant 0 : index
      %13 = vector.load %arg7[%c0_11, %c0_12] : memref<8x128xf32, #tpu.memory_space<vmem>>, vector<8x128xf32>
      tpu.vector_store %arg7[%c0_11, %c0_12], %12 {strides = array<i32>} : memref<8x128xf32, #tpu.memory_space<vmem>>, vector<8x128xf32>,
    } else {
    }
    %c0 = arith.constant 0 : index
    %c0_1 = arith.constant 0 : index
    %3 = vector.load %arg7[%c0, %c0_1] : memref<8x128xf32, #tpu.memory_space<vmem>>, vector<8x128xf32>
    %c0_2 = arith.constant 0 : index
    %c0_3 = arith.constant 0 : index
    %4 = vector.load %arg3[%c0_2, %c0_3] : memref<8x512xbf16, #tpu.memory_space<vmem>>, vector<8x512xbf16>
    %c0_4 = arith.constant 0 : index
    %c0_5 = arith.constant 0 : index
    %5 = vector.load %arg4[%c0_4, %c0_5] : memref<512x128xbf16, #tpu.memory_space<vmem>>, vector<512x128xbf16>
    %cst = arith.constant dense<0.000000e+00> : vector<8x128xf32>
    %6 = tpu.matmul %4, %5, %cst {dimension_numbers = #tpu.dot_dimension_numbers<[1], [0], [0], [1], [0, 0, 1, 1], [], []>} : vector<8x512xbf16>, vector<512x128xbf16>, vector<8x128xf32> -> vector<8x128xf32>
    %7 = arith.addf %3, %6 : vector<8x128xf32>
    %c0_6 = arith.constant 0 : index
    %c0_7 = arith.constant 0 : index
    %8 = vector.load %arg7[%c0_6, %c0_7] : memref<8x128xf32, #tpu.memory_space<vmem>>, vector<8x128xf32>
    tpu.vector_store %arg7[%c0_6, %c0_7], %7 {strides = array<i32>} : memref<8x128xf32, #tpu.memory_space<vmem>>, vector<8x128xf32>,
    %c0_i32_8 = arith.constant 0 : i32
    %9 = arith.cmpi eq, %arg2, %c0_i32_8 : i32
    %10 = arith.extui %9 : i1 to i32
    %c0_i32_9 = arith.constant 0 : i32
    %11 = arith.cmpi ne, %10, %c0_i32_9 : i32
    scf.if %11 {
      %c0_10 = arith.constant 0 : index
      %c0_11 = arith.constant 0 : index
      %12 = vector.load %arg7[%c0_10, %c0_11] : memref<8x128xf32, #tpu.memory_space<vmem>>, vector<8x128xf32>
      %c0_12 = arith.constant 0 : index
      %c0_13 = arith.constant 0 : index
      %13 = vector.load %arg5[%c0_12, %c0_13] : memref<1x128xf32, #tpu.memory_space<vmem>>, vector<1x128xf32>
      %14 = vector.broadcast %13 : vector<1x128xf32> to vector<8x128xf32>
      %15 = arith.addf %12, %14 : vector<8x128xf32>
      %16 = arith.truncf %15 : vector<8x128xf32> to vector<8x128xbf16>
      %c0_14 = arith.constant 0 : index
      %c0_15 = arith.constant 0 : index
      %17 = vector.load %arg6[%c0_14, %c0_15] : memref<8x128xbf16, #tpu.memory_space<vmem>>, vector<8x128xbf16>
      tpu.vector_store %arg6[%c0_14, %c0_15], %16 {strides = array<i32>} : memref<8x128xbf16, #tpu.memory_space<vmem>>, vector<8x128xbf16>,
    } else {
    }
    return
  }
  func.func @transform_0(%arg0: i32, %arg1: i32, %arg2: i32) -> (i32, i32) {
    %c0_i32 = arith.constant 0 : i32
    return %arg0, %arg2 : i32, i32
  }
  func.func @transform_1(%arg0: i32, %arg1: i32, %arg2: i32) -> (i32, i32) {
    %c0_i32 = arith.constant 0 : i32
    return %arg2, %arg1 : i32, i32
  }
  func.func @transform_2(%arg0: i32, %arg1: i32, %arg2: i32) -> (i32, i32) {
    %c0_i32 = arith.constant 0 : i32
    %c0_i32_0 = arith.constant 0 : i32
    return %c0_i32, %arg1 : i32, i32
  }
  func.func @transform_3(%arg0: i32, %arg1: i32, %arg2: i32) -> (i32, i32) {
    %c0_i32 = arith.constant 0 : i32
    return %arg0, %arg1 : i32, i32
  }
}

</mosaic_0001>

<llo_original>
// kernel: tpu_custom_call.1
$region0: #{tpu_custom_call.1}
  #allocation0 [shape = 'u32[]', space=smem, size = 0x4, offset = 0x4, fixed_abs, tag = 'smem constant byte address 0x4 - core index']
  #allocation1 [shape = 'u32[144,128]{1,0:T(1,128)}', space=vmem, size = 0x12000, scoped, tag = 'internal scratch']
  #allocation2 [shape = 'f32[8,128]{1,0:T(8,128)}', space=vmem, size = 0x1000, scoped, tag = 'scratch operand']
  %s0 = inlined_call_operand.hbm [shape: bf16[8,512], index: 0, kind: input, shape index: {}]
  %s1 = inlined_call_operand.hbm [shape: bf16[512,128], index: 1, kind: input, shape index: {}]
  %s2 = inlined_call_operand.vmem [shape: f32[1,128], index: 2, kind: input, shape index: {}]
  %s3 = inlined_call_operand.hbm [shape: bf16[8,128], index: 3, kind: output, shape index: {}]
  %s4 = sld [smem:[#allocation0]]
  $region38: #{tpu_custom_call.1} parent=0
    _
  %s6 = ssub.s32 1, %s4
  %s7 = scalar_select 0, %s6, %s4
  $region1: #{tpu_custom_call.1} parent=0
    #allocation3 [shape = 'u8[8192]{0}', space=vmem, size = 0x2000, scoped, tag = 'input window, operand 0, single buffered']
    #allocation4 [shape = 's32[1]{0}', space=sflag, size = 0x4, scoped, tag = 'scoped memory for tpu_custom_call.1']
    #allocation5 [shape = 's32[1]{0}', space=sflag, size = 0x4, scoped, tag = 'scoped memory for tpu_custom_call.1']
    #allocation6 [shape = 'u8[131072]{0}', space=vmem, size = 0x20000, scoped, tag = 'input window, operand 1, single buffered']
    #allocation7 [shape = 's32[1]{0}', space=sflag, size = 0x4, scoped, tag = 'scoped memory for tpu_custom_call.1']
    #allocation8 [shape = 'u8[2048]{0}', space=vmem, size = 0x800, scoped, tag = 'output window, operand 0, single buffered']
    %8 = vsyncpa [#allocation4], 0
    %9 = vsyncpa [#allocation7], 0
    %10 = vsyncpa [#allocation5], 0
    // Predicated region
    $region2: #{tpu_custom_call.1} parent=1 // pred_check
      _
    $region3: #{tpu_custom_call.1} parent=1 // pred_check_branch
      %12 = sbr.rel (0) target = $region5
    $region4: #{tpu_custom_call.1} parent=1 // pred_region
      %s14 = ssub.s32 256, 256
      %15 = vsyncadd [#allocation4], %s14
      %s17 = sshll.u32 [#allocation3], 4
      %s18 = int_to_ptr.vmem [resolvable:$true] %s17
      %20 = dma.hbm_to_vmem [thread:$0]  %s0, 256, %s18, [#allocation4]
    $region5: #{tpu_custom_call.1} parent=1 // pred_fallthru
      _
    // Predicated region
    $region6: #{tpu_custom_call.1} parent=1 // pred_check
      _
    $region7: #{tpu_custom_call.1} parent=1 // pred_check_branch
      %22 = sbr.rel (0) target = $region9
    $region8: #{tpu_custom_call.1} parent=1 // pred_region
      %s24 = ssub.s32 4096, 4096
      %25 = vsyncadd [#allocation7], %s24
      %s26 = sshll.u32 [#allocation6], 4
      %s27 = int_to_ptr.vmem [resolvable:$true] %s26
      %32 = dma.hbm_to_vmem [thread:$0]  %s1, 4096, %s27, [#allocation7], 64, 64, 4
    $region9: #{tpu_custom_call.1} parent=1 // pred_fallthru
      _
    // Predicated region
    $region10: #{tpu_custom_call.1} parent=1 // pred_check
      _
    $region11: #{tpu_custom_call.1} parent=1 // pred_check_branch
      %34 = sbr.rel (0) target = $region13
    $region12: #{tpu_custom_call.1} parent=1 // pred_region
      _
    $region13: #{tpu_custom_call.1} parent=1 // pred_fallthru
      _
    // Predicated region
    $region14: #{tpu_custom_call.1} parent=1 // pred_check
      _
    $region15: #{tpu_custom_call.1} parent=1 // pred_check_branch
      %36 = sbr.rel (0) target = $region17
    $region16: #{tpu_custom_call.1} parent=1 // pred_region
      %37 = dma.done [#allocation4], 256
    $region17: #{tpu_custom_call.1} parent=1 // pred_fallthru
      _
    // Predicated region
    $region18: #{tpu_custom_call.1} parent=1 // pred_check
      _
    $region19: #{tpu_custom_call.1} parent=1 // pred_check_branch
      %39 = sbr.rel (0) target = $region21
    $region20: #{tpu_custom_call.1} parent=1 // pred_region
      %40 = dma.done [#allocation7], 4096
    $region21: #{tpu_custom_call.1} parent=1 // pred_fallthru
      _
    %p42 = scmp.eq.s32.totalorder 0, 0
    // Predicated region
    $region22: #{tpu_custom_call.1} parent=1 // pred_check
      %p43 = pneg %p42
    $region23: #{tpu_custom_call.1} parent=1 // pred_check_branch
      %45 = sbr.rel (%p43) target = $region25
    $region24: #{tpu_custom_call.1} parent=1 // pred_region
      %46 = vst [vmem:[#allocation2] sm:$0xff] 0.0
    $region25: #{tpu_custom_call.1} parent=1 // pred_fallthru
      _
    %v47 = vld [vmem:[#allocation2] sm:$0xff]
    %v48 = vld [vmem:[#allocation3] sm:$0xff]
    %v49 = vld [vmem:[#allocation3 + $0x8] sm:$0xff]
    %v50 = vld [vmem:[#allocation6] sm:$0xf]
    %v51 = vld [vmem:[#allocation6 + $0x4] sm:$0xf]
    %v52 = vld [vmem:[#allocation6 + $0x8] sm:$0xf]
    %v53 = vld [vmem:[#allocation6 + $0xc] sm:$0xf]
    %v54 = vld [vmem:[#allocation6 + $0x10] sm:$0xf]
    %v55 = vld [vmem:[#allocation6 + $0x14] sm:$0xf]
    %v56 = vld [vmem:[#allocation6 + $0x18] sm:$0xf]
    %v57 = vld [vmem:[#allocation6 + $0x1c] sm:$0xf]
    %v58 = vld [vmem:[#allocation6 + $0x20] sm:$0xf]
    %v59 = vld [vmem:[#allocation6 + $0x24] sm:$0xf]
    %v60 = vld [vmem:[#allocation6 + $0x28] sm:$0xf]
    %v61 = vld [vmem:[#allocation6 + $0x2c] sm:$0xf]
    %v62 = vld [vmem:[#allocation6 + $0x30] sm:$0xf]
    %v63 = vld [vmem:[#allocation6 + $0x34] sm:$0xf]
    %v64 = vld [vmem:[#allocation6 + $0x38] sm:$0xf]
    %v65 = vld [vmem:[#allocation6 + $0x3c] sm:$0xf]
    %v66 = vld [vmem:[#allocation6 + $0x40] sm:$0xf]
    %v67 = vld [vmem:[#allocation6 + $0x44] sm:$0xf]
    %v68 = vld [vmem:[#allocation6 + $0x48] sm:$0xf]
    %v69 = vld [vmem:[#allocation6 + $0x4c] sm:$0xf]
    %v70 = vld [vmem:[#allocation6 + $0x50] sm:$0xf]
    %v71 = vld [vmem:[#allocation6 + $0x54] sm:$0xf]
    %v72 = vld [vmem:[#allocation6 + $0x58] sm:$0xf]
    %v73 = vld [vmem:[#allocation6 + $0x5c] sm:$0xf]
    %v74 = vld [vmem:[#allocation6 + $0x60] sm:$0xf]
    %v75 = vld [vmem:[#allocation6 + $0x64] sm:$0xf]
    %v76 = vld [vmem:[#allocation6 + $0x68] sm:$0xf]
    %v77 = vld [vmem:[#allocation6 + $0x6c] sm:$0xf]
    %v78 = vld [vmem:[#allocation6 + $0x70] sm:$0xf]
    %v79 = vld [vmem:[#allocation6 + $0x74] sm:$0xf]
    %v80 = vld [vmem:[#allocation6 + $0x78] sm:$0xf]
    %v81 = vld [vmem:[#allocation6 + $0x7c] sm:$0xf]
    %v82 = vld [vmem:[#allocation6 + $0x80] sm:$0xf]
    %v83 = vld [vmem:[#allocation6 + $0x84] sm:$0xf]
    %v84 = vld [vmem:[#allocation6 + $0x88] sm:$0xf]
    %v85 = vld [vmem:[#allocation6 + $0x8c] sm:$0xf]
    %v86 = vld [vmem:[#allocation6 + $0x90] sm:$0xf]
    %v87 = vld [vmem:[#allocation6 + $0x94] sm:$0xf]
    %v88 = vld [vmem:[#allocation6 + $0x98] sm:$0xf]
    %v89 = vld [vmem:[#allocation6 + $0x9c] sm:$0xf]
    %v90 = vld [vmem:[#allocation6 + $0xa0] sm:$0xf]
    %v91 = vld [vmem:[#allocation6 + $0xa4] sm:$0xf]
    %v92 = vld [vmem:[#allocation6 + $0xa8] sm:$0xf]
    %v93 = vld [vmem:[#allocation6 + $0xac] sm:$0xf]
    %v94 = vld [vmem:[#allocation6 + $0xb0] sm:$0xf]
    %v95 = vld [vmem:[#allocation6 + $0xb4] sm:$0xf]
    %v96 = vld [vmem:[#allocation6 + $0xb8] sm:$0xf]
    %v97 = vld [vmem:[#allocation6 + $0xbc] sm:$0xf]
    %v98 = vld [vmem:[#allocation6 + $0xc0] sm:$0xf]
    %v99 = vld [vmem:[#allocation6 + $0xc4] sm:$0xf]
    %v100 = vld [vmem:[#allocation6 + $0xc8] sm:$0xf]
    %v101 = vld [vmem:[#allocation6 + $0xcc] sm:$0xf]
    %v102 = vld [vmem:[#allocation6 + $0xd0] sm:$0xf]
    %v103 = vld [vmem:[#allocation6 + $0xd4] sm:$0xf]
    %v104 = vld [vmem:[#allocation6 + $0xd8] sm:$0xf]
    %v105 = vld [vmem:[#allocation6 + $0xdc] sm:$0xf]
    %v106 = vld [vmem:[#allocation6 + $0xe0] sm:$0xf]
    %v107 = vld [vmem:[#allocation6 + $0xe4] sm:$0xf]
    %v108 = vld [vmem:[#allocation6 + $0xe8] sm:$0xf]
    %v109 = vld [vmem:[#allocation6 + $0xec] sm:$0xf]
    %v110 = vld [vmem:[#allocation6 + $0xf0] sm:$0xf]
    %v111 = vld [vmem:[#allocation6 + $0xf4] sm:$0xf]
    %v112 = vld [vmem:[#allocation6 + $0xf8] sm:$0xf]
    %v113 = vld [vmem:[#allocation6 + $0xfc] sm:$0xf]
    %v116 = vunpack.c.l.b16 %v48
    %v117 = vunpack.c.h.b16 %v48
    %v118 = vunpack.c.l.b16 %v49
    %v119 = vunpack.c.h.b16 %v49
    %v120 = vpack.c.b16 %v116, %v116
    %v121 = vpack.c.b16 %v117, %v117
    %v122 = vpack.c.b16 %v118, %v118
    %v123 = vpack.c.b16 %v119, %v119
    %v192 = vunpack.c.l.b16 %v50
    %v193 = vunpack.c.l.b16 %v51
    %v194 = vunpack.c.l.b16 %v52
    %v195 = vunpack.c.l.b16 %v53
    %v196 = vunpack.c.l.b16 %v54
    %v197 = vunpack.c.l.b16 %v55
    %v198 = vunpack.c.l.b16 %v56
    %v199 = vunpack.c.l.b16 %v57
    %v200 = vunpack.c.l.b16 %v58
    %v201 = vunpack.c.l.b16 %v59
    %v202 = vunpack.c.l.b16 %v60
    %v203 = vunpack.c.l.b16 %v61
    %v204 = vunpack.c.l.b16 %v62
    %v205 = vunpack.c.l.b16 %v63
    %v206 = vunpack.c.l.b16 %v64
    %v207 = vunpack.c.l.b16 %v65
    %v208 = vunpack.c.l.b16 %v66
    %v209 = vunpack.c.l.b16 %v67
    %v210 = vunpack.c.l.b16 %v68
    %v211 = vunpack.c.l.b16 %v69
    %v212 = vunpack.c.l.b16 %v70
    %v213 = vunpack.c.l.b16 %v71
    %v214 = vunpack.c.l.b16 %v72
    %v215 = vunpack.c.l.b16 %v73
    %v216 = vunpack.c.l.b16 %v74
    %v217 = vunpack.c.l.b16 %v75
    %v218 = vunpack.c.l.b16 %v76
    %v219 = vunpack.c.l.b16 %v77
    %v220 = vunpack.c.l.b16 %v78
    %v221 = vunpack.c.l.b16 %v79
    %v222 = vunpack.c.l.b16 %v80
    %v223 = vunpack.c.l.b16 %v81
    %v224 = vunpack.c.l.b16 %v82
    %v225 = vunpack.c.l.b16 %v83
    %v226 = vunpack.c.l.b16 %v84
    %v227 = vunpack.c.l.b16 %v85
    %v228 = vunpack.c.l.b16 %v86
    %v229 = vunpack.c.l.b16 %v87
    %v230 = vunpack.c.l.b16 %v88
    %v231 = vunpack.c.l.b16 %v89
    %v232 = vunpack.c.l.b16 %v90
    %v233 = vunpack.c.l.b16 %v91
    %v234 = vunpack.c.l.b16 %v92
    %v235 = vunpack.c.l.b16 %v93
    %v236 = vunpack.c.l.b16 %v94
    %v237 = vunpack.c.l.b16 %v95
    %v238 = vunpack.c.l.b16 %v96
    %v239 = vunpack.c.l.b16 %v97
    %v240 = vunpack.c.l.b16 %v98
    %v241 = vunpack.c.l.b16 %v99
    %v242 = vunpack.c.l.b16 %v100
    %v243 = vunpack.c.l.b16 %v101
    %v244 = vunpack.c.l.b16 %v102
    %v245 = vunpack.c.l.b16 %v103
    %v246 = vunpack.c.l.b16 %v104
    %v247 = vunpack.c.l.b16 %v105
    %v248 = vunpack.c.l.b16 %v106
    %v249 = vunpack.c.l.b16 %v107
    %v250 = vunpack.c.l.b16 %v108
    %v251 = vunpack.c.l.b16 %v109
    %v252 = vunpack.c.l.b16 %v110
    %v253 = vunpack.c.l.b16 %v111
    %v254 = vunpack.c.l.b16 %v112
    %v255 = vunpack.c.l.b16 %v113
    %v256 = vpack.c.b16 %v193, %v192
    %v257 = vpack.c.b16 %v195, %v194
    %v258 = vpack.c.b16 %v197, %v196
    %v259 = vpack.c.b16 %v199, %v198
    %v260 = vpack.c.b16 %v201, %v200
    %v261 = vpack.c.b16 %v203, %v202
    %v262 = vpack.c.b16 %v205, %v204
    %v263 = vpack.c.b16 %v207, %v206
    %v264 = vpack.c.b16 %v209, %v208
    %v265 = vpack.c.b16 %v211, %v210
    %v266 = vpack.c.b16 %v213, %v212
    %v267 = vpack.c.b16 %v215, %v214
    %v268 = vpack.c.b16 %v217, %v216
    %v269 = vpack.c.b16 %v219, %v218
    %v270 = vpack.c.b16 %v221, %v220
    %v271 = vpack.c.b16 %v223, %v222
    %v272 = vpack.c.b16 %v225, %v224
    %v273 = vpack.c.b16 %v227, %v226
    %v274 = vpack.c.b16 %v229, %v228
    %v275 = vpack.c.b16 %v231, %v230
    %v276 = vpack.c.b16 %v233, %v232
    %v277 = vpack.c.b16 %v235, %v234
    %v278 = vpack.c.b16 %v237, %v236
    %v279 = vpack.c.b16 %v239, %v238
    %v280 = vpack.c.b16 %v241, %v240
    %v281 = vpack.c.b16 %v243, %v242
    %v282 = vpack.c.b16 %v245, %v244
    %v283 = vpack.c.b16 %v247, %v246
    %v284 = vpack.c.b16 %v249, %v248
    %v285 = vpack.c.b16 %v251, %v250
    %v286 = vpack.c.b16 %v253, %v252
    %v287 = vpack.c.b16 %v255, %v254
    %320 = vmatprep.subr.bf16.mxu0 0
    %321 = vmatpush1.bf16.msra.mxu0 %v256
    %322 = vmatprep.subr.bf16.mxu0 0
    %323 = vmatpush1.bf16.msra.mxu0 %v257
    %324 = vmatprep.subr.bf16.mxu0 0
    %325 = vmatpush1.bf16.msra.mxu0 %v258
    %326 = vmatprep.subr.bf16.mxu0 0
    %327 = vmatpush1.bf16.msra.mxu0 %v259
    %328 = vmatprep.subr.bf16.mxu0 0
    %329 = vmatpush1.bf16.msra.mxu0 %v260
    %330 = vmatprep.subr.bf16.mxu0 0
    %331 = vmatpush1.bf16.msra.mxu0 %v261
    %332 = vmatprep.subr.bf16.mxu0 0
    %333 = vmatpush1.bf16.msra.mxu0 %v262
    %334 = vmatprep.subr.bf16.mxu0 0
    %335 = vmatpush1.bf16.msra.mxu0 %v263
    %336 = vmatprep.subr.bf16.mxu0 0
    %337 = vmatpush1.bf16.msra.mxu0 %v264
    %338 = vmatprep.subr.bf16.mxu0 0
    %339 = vmatpush1.bf16.msra.mxu0 %v265
    %340 = vmatprep.subr.bf16.mxu0 0
    %341 = vmatpush1.bf16.msra.mxu0 %v266
    %342 = vmatprep.subr.bf16.mxu0 0
    %343 = vmatpush1.bf16.msra.mxu0 %v267
    %344 = vmatprep.subr.bf16.mxu0 0
    %345 = vmatpush1.bf16.msra.mxu0 %v268
    %346 = vmatprep.subr.bf16.mxu0 0
    %347 = vmatpush1.bf16.msra.mxu0 %v269
    %348 = vmatprep.subr.bf16.mxu0 0
    %349 = vmatpush1.bf16.msra.mxu0 %v270
    %350 = vmatprep.subr.bf16.mxu0 0
    %351 = vmatpush1.bf16.msra.mxu0 %v271
    %352 = vmatprep.mubr.bf16.mxu0 %v121
    %353 = vmatmul.mubr.bf16.gmra.mrb[0].mxu0 %v120
    %v354 = vpop.f32.mrb[0].mxu0
    %v355 = vadd.f32 0.0, %v354
    %v356 = vpop.f32.mrb[0].mxu0
    %v357 = vpop.f32.mrb[0].mxu0
    %v358 = vpop.f32.mrb[0].mxu0
    %359 = vdwg.mxu0
    %360 = vmatprep.subr.bf16.mxu0 0
    %361 = vmatpush1.bf16.msra.mxu0 %v272
    %362 = vmatprep.subr.bf16.mxu0 0
    %363 = vmatpush1.bf16.msra.mxu0 %v273
    %364 = vmatprep.subr.bf16.mxu0 0
    %365 = vmatpush1.bf16.msra.mxu0 %v274
    %366 = vmatprep.subr.bf16.mxu0 0
    %367 = vmatpush1.bf16.msra.mxu0 %v275
    %368 = vmatprep.subr.bf16.mxu0 0
    %369 = vmatpush1.bf16.msra.mxu0 %v276
    %370 = vmatprep.subr.bf16.mxu0 0
    %371 = vmatpush1.bf16.msra.mxu0 %v277
    %372 = vmatprep.subr.bf16.mxu0 0
    %373 = vmatpush1.bf16.msra.mxu0 %v278
    %374 = vmatprep.subr.bf16.mxu0 0
    %375 = vmatpush1.bf16.msra.mxu0 %v279
    %376 = vmatprep.subr.bf16.mxu0 0
    %377 = vmatpush1.bf16.msra.mxu0 %v280
    %378 = vmatprep.subr.bf16.mxu0 0
    %379 = vmatpush1.bf16.msra.mxu0 %v281
    %380 = vmatprep.subr.bf16.mxu0 0
    %381 = vmatpush1.bf16.msra.mxu0 %v282
    %382 = vmatprep.subr.bf16.mxu0 0
    %383 = vmatpush1.bf16.msra.mxu0 %v283
    %384 = vmatprep.subr.bf16.mxu0 0
    %385 = vmatpush1.bf16.msra.mxu0 %v284
    %386 = vmatprep.subr.bf16.mxu0 0
    %387 = vmatpush1.bf16.msra.mxu0 %v285
    %388 = vmatprep.subr.bf16.mxu0 0
    %389 = vmatpush1.bf16.msra.mxu0 %v286
    %390 = vmatprep.subr.bf16.mxu0 0
    %391 = vmatpush1.bf16.msra.mxu0 %v287
    %392 = vmatprep.mubr.bf16.mxu0 %v123
    %393 = vmatmul.mubr.bf16.gmra.mrb[0].mxu0 %v122
    %v394 = vpop.f32.mrb[0].mxu0
    %v395 = vadd.f32 %v355, %v394
    %v396 = vpop.f32.mrb[0].mxu0
    %v397 = vpop.f32.mrb[0].mxu0
    %v398 = vpop.f32.mrb[0].mxu0
    %399 = vdwg.mxu0
    %v400 = vadd.f32 %v47, %v395
    %401 = vst [vmem:[#allocation2] sm:$0xff] %v400
    // Predicated region
    $region26: #{tpu_custom_call.1} parent=1 // pred_check
      %p402 = pneg %p42
    $region27: #{tpu_custom_call.1} parent=1 // pred_check_branch
      %404 = sbr.rel (%p402) target = $region29
    $region28: #{tpu_custom_call.1} parent=1 // pred_region
      %v405 = vld [vmem:[#allocation2] sm:$0xff]
      %v406 = vld [vmem:[%s2] sm:$0x1]
      %v408 = vlaneseq
      %v409 = vshrl.u32 %v408, 7
      %v410 = vsub.s32 0, %v409
      %v411 = vrot.slane %v406, %v410
      %v413 = vadd.f32 %v405, %v411
      %v414 = vpack.c.bf16 %v413, %v413
      %415 = vst [vmem:[#allocation8] sm:$0xf] %v414
    $region29: #{tpu_custom_call.1} parent=1 // pred_fallthru
      _
    // Predicated region
    $region30: #{tpu_custom_call.1} parent=1 // pred_check
      _
    $region31: #{tpu_custom_call.1} parent=1 // pred_check_branch
      %417 = sbr.rel (0) target = $region33
    $region32: #{tpu_custom_call.1} parent=1 // pred_region
      %s419 = ssub.s32 64, 64
      %420 = vsyncadd [#allocation5], %s419
      %s422 = sshll.u32 [#allocation8], 4
      %s423 = int_to_ptr.vmem [resolvable:$true] %s422
      %425 = dma.vmem_to_hbm [thread:$0]  %s423, 64, %s3, [#allocation5]
    $region33: #{tpu_custom_call.1} parent=1 // pred_fallthru
      _
    // Predicated region
    $region34: #{tpu_custom_call.1} parent=1 // pred_check
      _
    $region35: #{tpu_custom_call.1} parent=1 // pred_check_branch
      %427 = sbr.rel (0) target = $region37
    $region36: #{tpu_custom_call.1} parent=1 // pred_region
      %428 = dma.done [#allocation5], 64
    $region37: #{tpu_custom_call.1} parent=1 // pred_fallthru
      _
    %429 = vsyncpa [#allocation4], 1
    %430 = vsyncpa [#allocation7], 1
    %431 = vsyncpa [#allocation5], 1

</llo_original>
